<compile_context>
chip_gen: v7x
topology: tpu7x:2x2x1
jax: 0.10.0
libtpu: 0.0.40
codegen_flags: <defaults>
</compile_context>

<pallas_src>
import math

import jax
import jax.numpy as jnp
from jax.experimental import pallas as pl
from jax.experimental.pallas import tpu as pltpu


def _round_up(x, m):
    return (x + m - 1) // m * m


def _pick_tile(total, cap):
    """Largest multiple-of-128 divisor of `total` (itself a multiple of 128) <= cap."""
    d = min(cap, total)
    d -= d % 128
    while d > 128 and total % d:
        d -= 128
    return max(d, 128)


# ---------------------------------------------------------------------------
# Fused matmul kernel:
#   out = (x @ w) [+ bias]                      (conv bias)
#         [* post_scale + post_bias]            (series 'channel' adapter)
#         [+ residual [* res_scale + res_bias]] (residual adapter, fused add)
# Per-channel vectors arrive packed in one (8, tn) f32 block:
#   row 0 = bias, 1 = post_scale, 2 = post_bias, 3 = res_scale, 4 = res_bias.
# ---------------------------------------------------------------------------
def _make_fused_kernel(k_steps, has_vec, has_bias, has_post, has_res,
                       has_res_affine):
    multi_k = k_steps > 1

    def epilogue(y, vec_ref, r_ref):
        if has_bias:
            y = y + vec_ref[0:1, :]
        if has_post:
            y = y * vec_ref[1:2, :] + vec_ref[2:3, :]
        if has_res:
            r = r_ref[...]                         # already f32
            if has_res_affine:
                r = r * vec_ref[3:4, :] + vec_ref[4:5, :]
            y = y + r
        return y

    def kernel(*refs):
        idx = 0
        x_ref = refs[idx]; idx += 1
        w_ref = refs[idx]; idx += 1
        vec_ref = refs[idx] if has_vec else None
        idx += 1 if has_vec else 0
        r_ref = refs[idx] if has_res else None
        idx += 1 if has_res else 0
        o_ref = refs[idx]; idx += 1
        acc_ref = refs[idx] if multi_k else None

        if multi_k:
            k = pl.program_id(2)

            @pl.when(k == 0)
            def _():
                acc_ref[...] = jnp.zeros_like(acc_ref)

            acc_ref[...] += jnp.dot(x_ref[...], w_ref[...],
                                    preferred_element_type=jnp.float32)

            @pl.when(k == pl.num_programs(2) - 1)
            def _():
                o_ref[...] = epilogue(acc_ref[...], vec_ref,
                                      r_ref).astype(o_ref.dtype)
        else:
            # Single K step: no zero-init, no output RMW -- dot, epilogue, store.
            y = jnp.dot(x_ref[...], w_ref[...],
                        preferred_element_type=jnp.float32)
            o_ref[...] = epilogue(y, vec_ref, r_ref).astype(o_ref.dtype)

    return kernel


# ---------------------------------------------------------------------------
# Weight preparation (hoisted to init: pad + cast to bf16 once per layer)
# ---------------------------------------------------------------------------
def _prep_weight_matrix(wmat):
    K, N = wmat.shape
    Kp, Np = _round_up(K, 128), _round_up(N, 128)
    return {'mat': jnp.pad(wmat, ((0, Kp - K), (0, Np - N))).astype(jnp.bfloat16),
            'k': K, 'n': N}


def _prep_conv_weight(w_hwio):
    kh, kw, cin, cout = w_hwio.shape
    p = _prep_weight_matrix(w_hwio.reshape(kh * kw * cin, cout))
    p.update(kh=kh, kw=kw, cin=cin, cout=cout)
    return p


# ---------------------------------------------------------------------------
# Fused matmul wrapper
# ---------------------------------------------------------------------------
def fused_matmul(x, w_p, bias=None, post=None, residual=None, res_affine=None,
                 out_dtype=jnp.float32, tm_cap=512, tn_cap=512, tk_cap=2048):
    """out = epilogue(x @ w); bf16 MXU operands, f32 accumulation.

    x: (M, K); w_p: prepared padded bf16 weight dict; bias / post=(s,b) /
    res_affine=(s,b) are per-output-channel (N,) vectors; residual: (M, N) f32.
    """
    M, K = x.shape
    assert K == w_p['k'], (K, w_p['k'])
    N = w_p['n']
    wp = w_p['mat']
    Kp, Np = wp.shape

    tn = _pick_tile(Np, tn_cap)
    tk = _pick_tile(Kp, tk_cap)
    tm = min(tm_cap, _round_up(M, 16))           # 16: bf16 sublane packing
    Mp = _round_up(M, tm)
    # v7x megacore: keep a parallel grid extent >= 2 when possible.
    if Mp // tm == 1 and Np // tn == 1 and M > 16:
        tm = _round_up(-(-Mp // 2), 16)
        Mp = _round_up(M, tm)
    k_steps = Kp // tk

    xp = jnp.pad(x, ((0, Mp - M), (0, Kp - K)))
    if xp.dtype != jnp.bfloat16:
        xp = xp.astype(jnp.bfloat16)

    inputs = [xp, wp]
    in_specs = [pl.BlockSpec((tm, tk), lambda i, j, k: (i, k)),
                pl.BlockSpec((tk, tn), lambda i, j, k: (k, j))]

    has_bias = bias is not None
    has_post = post is not None
    has_res = residual is not None
    has_res_affine = res_affine is not None
    if has_res_affine:
        assert has_res
    has_vec = has_bias or has_post or has_res_affine

    if has_vec:
        vec = jnp.zeros((8, Np), jnp.float32)
        def put(v, row, vec=None):
            return vec.at[row, :N].set(v.astype(jnp.float32).reshape(-1))
        if has_bias:
            vec = put(bias, 0, vec=vec)
        if has_post:
            vec = put(post[0], 1, vec=vec)
            vec = put(post[1], 2, vec=vec)
        if has_res_affine:
            vec = put(res_affine[0], 3, vec=vec)
            vec = put(res_affine[1], 4, vec=vec)
        inputs.append(vec)
        in_specs.append(pl.BlockSpec((8, tn), lambda i, j, k: (0, j)))

    if has_res:
        # Residual stays f32: it only feeds the VPU epilogue, never the MXU.
        rp = jnp.pad(residual.astype(jnp.float32), ((0, Mp - M), (0, Np - N)))
        inputs.append(rp)
        in_specs.append(pl.BlockSpec((tm, tn), lambda i, j, k: (i, j)))

    scratch_shapes = []
    if k_steps > 1:
        scratch_shapes.append(pltpu.VMEM((tm, tn), jnp.float32))

    out_itemsize = jnp.dtype(out_dtype).itemsize
    vmem_bytes = 2 * (tm * tk * 2 + tk * tn * 2
                      + (8 * tn * 4 if has_vec else 0)
                      + (tm * tn * 4 if has_res else 0)
                      + tm * tn * out_itemsize)
    if k_steps > 1:
        vmem_bytes += tm * tn * 4
    vmem_bytes = int(min(max(vmem_bytes + (2 << 20), 8 << 20), 48 << 20))

    out = pl.pallas_call(
        _make_fused_kernel(k_steps, has_vec, has_bias, has_post, has_res,
                           has_res_affine),
        out_shape=jax.ShapeDtypeStruct((Mp, Np), out_dtype),
        grid_spec=pltpu.PrefetchScalarGridSpec(
            num_scalar_prefetch=0,
            grid=(Mp // tm, Np // tn, k_steps),
            in_specs=in_specs,
            out_specs=pl.BlockSpec((tm, tn), lambda i, j, k: (i, j)),
            scratch_shapes=scratch_shapes),
        compiler_params=pltpu.CompilerParams(
            dimension_semantics=("parallel", "parallel", "arbitrary"),
            vmem_limit_bytes=vmem_bytes),
    )(*inputs)
    return out[:M, :N]


# ---------------------------------------------------------------------------
# Convolution = im2col (bf16 glue) + fused Pallas matmul
# ---------------------------------------------------------------------------
def _im2col(x, kh, kw, stride, pad):
    N, H, W, C = x.shape
    Ho = (H + 2 * pad - kh) // stride + 1
    Wo = (W + 2 * pad - kw) // stride + 1
    xp = jnp.pad(x, ((0, 0), (pad, pad), (pad, pad), (0, 0)))
    cols = [xp[:, i:i + stride * Ho:stride, j:j + stride * Wo:stride, :]
            for i in range(kh) for j in range(kw)]
    patches = jnp.concatenate(cols, axis=-1)            # (N, Ho, Wo, kh*kw*C)
    return patches.reshape(N * Ho * Wo, kh * kw * C), (N, Ho, Wo)


def conv2d_nhwc(x, w_p, bias=None, stride=1, pad=0, post=None,
                residual2d=None, res_affine=None, out_dtype=jnp.float32):
    if x.dtype != jnp.bfloat16:
        x = x.astype(jnp.bfloat16)          # build the duplicated patches in bf16
    patches, (N, Ho, Wo) = _im2col(x, w_p['kh'], w_p['kw'], stride, pad)
    y = fused_matmul(patches, w_p, bias=bias, post=post,
                     residual=residual2d, res_affine=res_affine,
                     out_dtype=out_dtype)
    return y.reshape(N, Ho, Wo, w_p['cout'])


# ---------------------------------------------------------------------------
# TSA_Conv2d parameters (deterministic) and forward pass
# ---------------------------------------------------------------------------
def init_tsa_conv2d(key, in_channels, out_channels, kernel_size, stride,
                    padding, num_adapters, ad_type, ad_form):
    ks = jax.random.split(key, 2 + num_adapters)
    fan_in = in_channels * kernel_size * kernel_size
    bound = 1.0 / math.sqrt(fan_in)
    w = jax.random.uniform(
        ks[0], (kernel_size, kernel_size, in_channels, out_channels),
        jnp.float32, -bound, bound)
    b = jax.random.uniform(ks[1], (out_channels,), jnp.float32, -bound, bound)
    params = {'op': {'w': w, 'b': b, 'w_p': _prep_conv_weight(w)},
              'cfg': {'stride': stride, 'padding': padding,
                      'ad_type': ad_type, 'ad_form': ad_form}}
    if ad_form == 'matrix':
        a_k = 3 if (ad_type == 'residual' and stride == 2) else 1
        alphas = []
        for i in range(num_adapters):
            aw = jnp.zeros((a_k, a_k, out_channels, out_channels), jnp.float32)
            aw = aw.at[a_k // 2, a_k // 2,
                       jnp.arange(out_channels),
                       jnp.arange(out_channels)].set(1.0)      # nn.init.dirac_
            ab_bound = 1.0 / math.sqrt(out_channels * a_k * a_k)
            ab = jax.random.uniform(ks[2 + i], (out_channels,), jnp.float32,
                                    -ab_bound, ab_bound)
            alphas.append({'w': aw, 'b': ab, 'w_p': _prep_conv_weight(aw)})
        params['alpha'] = alphas
    else:
        # module initializes both scale and bias to ones
        params['alpha'] = [jnp.ones((1, out_channels, 1, 1), jnp.float32)
                           for _ in range(num_adapters)]
        params['alpha_bias'] = [jnp.ones((1, out_channels, 1, 1), jnp.float32)
                                for _ in range(num_adapters)]
    return params


def tsa_conv2d_apply_nhwc(params, x_nhwc, adapt_idx=None):
    """Core forward in NHWC (keep activations NHWC between layers)."""
    cfg = params['cfg']
    ad_type, ad_form = cfg['ad_type'], cfg['ad_form']
    stride, pad = cfg['stride'], cfg['padding']
    op = params['op']
    cout = op['w_p']['cout']
    kh = op['w_p']['kh']

    x_f32 = x_nhwc.astype(jnp.float32)
    x_bf = x_nhwc.astype(jnp.bfloat16)      # single cast, shared by all branches

    if adapt_idx is None:
        return conv2d_nhwc(x_bf, op['w_p'], op['b'], stride, pad)

    if ad_type == 'residual':
        if ad_form == 'matrix':
            a = params['alpha'][adapt_idx]
            a_k = a['w_p']['kh']
            a_stride = 2 if stride == 2 else 1
            a_pad = 1 if a_k == 3 else 0
            # alpha(x) feeds the residual epilogue -> keep it f32.
            res = conv2d_nhwc(x_bf, a['w_p'], a['b'], a_stride, a_pad)
            Nb, Ho, Wo, _ = res.shape
            y = conv2d_nhwc(x_bf, op['w_p'], op['b'], stride, pad,   # op(x)+alpha(x)
                            residual2d=res.reshape(Nb * Ho * Wo, cout))
        else:
            # op(x) + x * alpha + alpha_bias
            Nb, H, W, C = x_f32.shape
            Ho = (H + 2 * pad - kh) // stride + 1
            Wo = (W + 2 * pad - kh) // stride + 1
            assert stride == 1 and C == cout and (Ho, Wo) == (H, W), (
                "residual 'channel' adapter requires stride 1, 'same' padding "
                "and in_channels == out_channels "
                f"(got stride={stride}, C={C}, cout={cout}, out={(Ho, Wo)}, in={(H, W)})")
            alpha = params['alpha'][adapt_idx].reshape(-1)
            alpha_b = params['alpha_bias'][adapt_idx].reshape(-1)
            y = conv2d_nhwc(x_bf, op['w_p'], op['b'], stride, pad,
                            residual2d=x_f32.reshape(Nb * H * W, C),
                            res_affine=(alpha, alpha_b))
    else:  # series
        if ad_form == 'matrix':
            a = params['alpha'][adapt_idx]                 # 1x1 conv with bias
            # op(x) only feeds the next bf16 matmul -> emit it in bf16.
            op_x = conv2d_nhwc(x_bf, op['w_p'], op['b'], stride, pad,
                               out_dtype=jnp.bfloat16)
            Nb, Ho, Wo, _ = op_x.shape
            y2 = fused_matmul(op_x.reshape(Nb * Ho * Wo, cout), a['w_p'],
                              bias=a['b'])
            y = y2.reshape(Nb, Ho, Wo, cout)
        else:
            # op(x) * alpha + alpha_bias, fused into the conv epilogue
            alpha = params['alpha'][adapt_idx].reshape(-1)
            alpha_b = params['alpha_bias'][adapt_idx].reshape(-1)
            y = conv2d_nhwc(x_bf, op['w_p'], op['b'], stride, pad,
                            post=(alpha, alpha_b))
    return y


def tsa_conv2d_forward(params, x_nchw, adapt_idx=None):
    """Public NCHW entry point (PyTorch convention); NHWC internally."""
    x = jnp.transpose(x_nchw, (0, 2, 3, 1))
    y = tsa_conv2d_apply_nhwc(params, x, adapt_idx=adapt_idx)
    return jnp.transpose(y, (0, 3, 1, 2))


# ---------------------------------------------------------------------------
# Pure-JAX reference (XLA convs) for correctness checking
# ---------------------------------------------------------------------------
def _ref_conv(x_nchw, w_hwio, bias, stride, pad):
    y = jax.lax.conv_general_dilated(
        x_nchw, w_hwio, window_strides=(stride, stride),
        padding=[(pad, pad), (pad, pad)],
        dimension_numbers=('NCHW', 'HWIO', 'NCHW'))
    if bias is not None:
        y = y + bias[None, :, None, None]
    return y


def tsa_conv2d_reference(params, x_nchw, adapt_idx=None):
    cfg = params['cfg']
    op = params['op']
    s, p = cfg['stride'], cfg['padding']
    op_x = _ref_conv(x_nchw, op['w'], op['b'], s, p)
    if adapt_idx is None:
        return op_x
    ad_type, ad_form = cfg['ad_type'], cfg['ad_form']
    if ad_type == 'residual':
        if ad_form == 'matrix':
            a = params['alpha'][adapt_idx]
            a_k = a['w'].shape[0]
            out = _ref_conv(x_nchw, a['w'], a['b'],
                            2 if s == 2 else 1, 1 if a_k == 3 else 0)
        else:
            out = x_nchw * params['alpha'][adapt_idx] + params['alpha_bias'][adapt_idx]
        return op_x + out
    else:
        if ad_form == 'matrix':
            a = params['alpha'][adapt_idx]
            return _ref_conv(op_x, a['w'], a['b'], 1, 0)
        else:
            return op_x * params['alpha'][adapt_idx] + params['alpha_bias'][adapt_idx]


def _check(name, got, want, tol=5e-2):
    err = float(jnp.max(jnp.abs(got.astype(jnp.float32) - want)))
    assert bool(jnp.all(jnp.isfinite(got))), f"{name}: non-finite output"
    assert err < tol, f"{name}: max abs err {err}"


if __name__ == "__main__":
    key = jax.random.PRNGKey(0)
    kx, kp = jax.random.split(key)
    x = jax.random.normal(kx, (2, 4, 16, 16), jnp.float32)   # NCHW like torch

    configs = [
        dict(name="residual/matrix/s2", ad_type="residual", ad_form="matrix",
             stride=2, padding=1, kernel=3, adapt_idx=1),
        dict(name="residual/channel/s1", ad_type="residual", ad_form="channel",
             stride=1, padding=1, kernel=3, adapt_idx=0),
        dict(name="series/matrix/s2", ad_type="series", ad_form="matrix",
             stride=2, padding=1, kernel=3, adapt_idx=0),
        dict(name="series/channel/s1", ad_type="series", ad_form="channel",
             stride=1, padding=1, kernel=3, adapt_idx=1),
        dict(name="no-adapter", ad_type="residual", ad_form="matrix",
             stride=2, padding=1, kernel=3, adapt_idx=None),
    ]

    outs = []
    for i, cfg in enumerate(configs):
        pkey = jax.random.fold_in(kp, i)
        params = init_tsa_conv2d(pkey, in_channels=4, out_channels=4,
                                 kernel_size=cfg["kernel"], stride=cfg["stride"],
                                 padding=cfg["padding"], num_adapters=2,
                                 ad_type=cfg["ad_type"], ad_form=cfg["ad_form"])
        y = tsa_conv2d_forward(params, x, adapt_idx=cfg["adapt_idx"])
        y = jax.block_until_ready(y)
        y_ref = tsa_conv2d_reference(params, x, adapt_idx=cfg["adapt_idx"])
        _check(cfg["name"], y, y_ref)
        outs.append(y)

    # Sanity-check the multi-K-step accumulator path (not hit by the conv
    # shapes above, where K collapses to a single grid step).
    ka, kb, kc = jax.random.split(jax.random.fold_in(key, 7), 3)
    a = jax.random.normal(ka, (64, 256), jnp.float32)
    b = jax.random.uniform(kb, (256, 128), jnp.float32, -0.05, 0.05)
    bias = jax.random.normal(kc, (128,), jnp.float32)
    got = fused_matmul(a, _prep_weight_matrix(b), bias=bias, tk_cap=128)
    _check("multi-k matmul", got, a @ b + bias[None, :])
    outs.append(got)

    jax.block_until_ready(outs)
    print("KERNEL_OK")
</pallas_src>

<mosaic_0001>
module attributes {stable_mosaic.version = 11 : i64} {
  func.func @kernel(%arg0: i32, %arg1: i32, %arg2: i32, %arg3: memref<64x128xbf16, #tpu.memory_space<vmem>>, %arg4: memref<128x128xbf16, #tpu.memory_space<vmem>>, %arg5: memref<8x128xf32, #tpu.memory_space<vmem>>, %arg6: memref<64x128xf32, #tpu.memory_space<vmem>>) attributes {dimension_semantics = [#tpu.dimension_semantics<parallel>, #tpu.dimension_semantics<parallel>, #tpu.dimension_semantics<arbitrary>], iteration_bounds = array<i64: 2, 1, 1>, scalar_prefetch = 0 : i64, scratch_operands = 0 : i64, tpu.core_type = #tpu.core_type<tc>, window_params = [{transform_indices = @transform_0, window_bounds = array<i64: 64, 128>}, {transform_indices = @transform_1, window_bounds = array<i64: 128, 128>}, {transform_indices = @transform_2, window_bounds = array<i64: 8, 128>}, {transform_indices = @transform_3, window_bounds = array<i64: 64, 128>}]} {
    %c0 = arith.constant 0 : index
    %c0_0 = arith.constant 0 : index
    %0 = vector.load %arg3[%c0, %c0_0] : memref<64x128xbf16, #tpu.memory_space<vmem>>, vector<64x128xbf16>
    %c0_1 = arith.constant 0 : index
    %c0_2 = arith.constant 0 : index
    %1 = vector.load %arg4[%c0_1, %c0_2] : memref<128x128xbf16, #tpu.memory_space<vmem>>, vector<128x128xbf16>
    %cst = arith.constant dense<0.000000e+00> : vector<64x128xf32>
    %2 = tpu.matmul %0, %1, %cst {dimension_numbers = #tpu.dot_dimension_numbers<[1], [0], [0], [1], [0, 0, 1, 1], [], []>} : vector<64x128xbf16>, vector<128x128xbf16>, vector<64x128xf32> -> vector<64x128xf32>
    %c0_3 = arith.constant 0 : index
    %c0_4 = arith.constant 0 : index
    %3 = vector.load %arg5[%c0_3, %c0_4] : memref<8x128xf32, #tpu.memory_space<vmem>>, vector<1x128xf32>
    %4 = vector.broadcast %3 : vector<1x128xf32> to vector<64x128xf32>
    %5 = arith.addf %2, %4 : vector<64x128xf32>
    %c0_5 = arith.constant 0 : index
    %c0_6 = arith.constant 0 : index
    %6 = vector.load %arg6[%c0_5, %c0_6] : memref<64x128xf32, #tpu.memory_space<vmem>>, vector<64x128xf32>
    tpu.vector_store %arg6[%c0_5, %c0_6], %5 {strides = array<i32>} : memref<64x128xf32, #tpu.memory_space<vmem>>, vector<64x128xf32>,
    return
  }
  func.func @transform_0(%arg0: i32, %arg1: i32, %arg2: i32) -> (i32, i32) {
    %c0_i32 = arith.constant 0 : i32
    return %arg0, %arg2 : i32, i32
  }
  func.func @transform_1(%arg0: i32, %arg1: i32, %arg2: i32) -> (i32, i32) {
    %c0_i32 = arith.constant 0 : i32
    return %arg2, %arg1 : i32, i32
  }
  func.func @transform_2(%arg0: i32, %arg1: i32, %arg2: i32) -> (i32, i32) {
    %c0_i32 = arith.constant 0 : i32
    %c0_i32_0 = arith.constant 0 : i32
    return %c0_i32, %arg1 : i32, i32
  }
  func.func @transform_3(%arg0: i32, %arg1: i32, %arg2: i32) -> (i32, i32) {
    %c0_i32 = arith.constant 0 : i32
    return %arg0, %arg1 : i32, i32
  }
}

</mosaic_0001>

<llo_original>
// kernel: tpu_custom_call.1
$region0: #{tpu_custom_call.1}
  #allocation0 [shape = 'u32[]', space=smem, size = 0x4, offset = 0x4, fixed_abs, tag = 'smem constant byte address 0x4 - core index']
  #allocation1 [shape = 'u32[144,128]{1,0:T(1,128)}', space=vmem, size = 0x12000, scoped, tag = 'internal scratch']
  %s0 = inlined_call_operand.hbm [shape: bf16[128,128], index: 0, kind: input, shape index: {}]
  %s1 = inlined_call_operand.hbm [shape: bf16[128,128], index: 1, kind: input, shape index: {}]
  %s2 = inlined_call_operand.hbm [shape: f32[8,128], index: 2, kind: input, shape index: {}]
  %s3 = inlined_call_operand.hbm [shape: f32[128,128], index: 3, kind: output, shape index: {}]
  %s4 = sld [smem:[#allocation0]]
  $region57: #{tpu_custom_call.1} parent=0
    _
  %s6 = ssub.s32 1, %s4
  %s7 = scalar_select 0, %s6, %s4
  $region1: #{tpu_custom_call.1} parent=0
    #allocation2 [shape = 'u8[32768]{0}', space=vmem, size = 0x8000, scoped, tag = 'input window, operand 0']
    #allocation3 [shape = 's32[2]{0}', space=sflag, size = 0x8, scoped, tag = 'scoped memory for tpu_custom_call.1']
    #allocation4 [shape = 's32[2]{0}', space=sflag, size = 0x8, scoped, tag = 'scoped memory for tpu_custom_call.1']
    #allocation5 [shape = 'u8[32768]{0}', space=vmem, size = 0x8000, scoped, tag = 'input window, operand 1, single buffered']
    #allocation6 [shape = 's32[1]{0}', space=sflag, size = 0x4, scoped, tag = 'scoped memory for tpu_custom_call.1']
    #allocation7 [shape = 'u8[4096]{0}', space=vmem, size = 0x1000, scoped, tag = 'input window, operand 2, single buffered']
    #allocation8 [shape = 'u8[65536]{0}', space=vmem, size = 0x10000, scoped, tag = 'output window, operand 0']
    %8 = vsyncpa [#allocation3], 0
    %s9 = scalar_lea.sflag [#allocation3], 1
    %10 = vsyncpa %s9, 0
    %11 = vsyncpa [#allocation6], 0
    %12 = vsyncpa [#allocation4], 0
    %s13 = scalar_lea.sflag [#allocation4], 1
    %14 = vsyncpa %s13, 0
    loop: start=0, step=1, limit=4
    $region2: #{tpu_custom_call.1} parent=1 // loop_pre_header
      _
    $region3: #{tpu_custom_call.1} parent=1 // loop_header
      %s16 = sphi 0, %s20
      %p17 = scmp.ge.s32.totalorder %s16, 4
      %s23 = sphi 0, %s42
      %s24 = sphi 0, %s38
      %s25 = sphi 0, %s34
      %s26 = sphi 0, %s23
      %s27 = sphi 0, %s24
      %s28 = sphi 0, %s25
      %s29 = sphi 0, %s26
      %s30 = sphi 0, %s27
      %s31 = sphi 0, %s28
      %s47 = sphi 0, %s49
      %s50 = sphi 0, %s47
      %s51 = sphi 0, %s50
      %s67 = sphi 0, %s51
      %s75 = sphi 0, %s77
      %s78 = sphi 0, %s75
      %s79 = sphi 0, %s78
      %s95 = sphi 0, %s79
      %s101 = sphi 0, %s103
      %s104 = sphi 0, %s101
      %s105 = sphi 0, %s104
      %s121 = sphi 0, %s105
      %s129 = sphi 0, %s131
      %s132 = sphi 0, %s129
      %s133 = sphi 0, %s132
      %s149 = sphi 0, %s133
    $region4: #{tpu_custom_call.1} parent=1 // loop_header_branch
      %19 = sbr.rel (%p17) target = $region8
    $region5: #{tpu_custom_call.1} parent=1 // loop_body
      %s21 = ssub.s32 %s16, 1
      %s22 = ssub.s32 %s16, 2
      %s32 = sadd.s32 1, %s25
      %p33 = scmp.ge.s32.totalorder %s32, 1
      %s34 = scalar_select %p33, 0, %s32
      %s35 = sadd.s32 1, %s24
      %s36 = scalar_select %p33, %s35, %s24
      %p37 = scmp.ge.s32.totalorder %s36, 1
      %s38 = scalar_select %p37, 0, %s36
      %s39 = sadd.s32 1, %s23
      %s40 = scalar_select %p37, %s39, %s23
      %p41 = scmp.ge.s32.totalorder %s40, 2
      %s42 = scalar_select %p41, 0, %s40
      %s43 = ssub.s32 %s23, %s42
      %s44 = ssub.s32 %s25, %s34
      %s45 = sor.u32 %s43, %s44
      %p46 = scmp.eq.s32.totalorder %s45, 0
      %s48 = sadd.s32 %s47, 1
      %s49 = scalar_select %p46, %s47, %s48
      %p52 = pneg %p46
      %p53 = scmp.eq.s32.totalorder %s16, 1
      %p54 = por %p52, %p53
      %p55 = scmp.ne.s32.totalorder %s47, %s50
      %p56 = scmp.eq.s32.totalorder %s16, 0
      %p57 = por %p55, %p56
      %p58 = scmp.ne.s32.totalorder %s47, %s50
      %p59 = scmp.eq.s32.totalorder %s21, 1
      %p60 = por %p58, %p59
      %p61 = scmp.ne.s32.totalorder %s50, %s51
      %p62 = scmp.eq.s32.totalorder %s21, 0
      %p63 = por %p61, %p62
      %p64 = scmp.ne.s32.totalorder %s50, %s51
      %p65 = scmp.eq.s32.totalorder %s22, 1
      %p66 = por %p64, %p65
      %p68 = scmp.ne.s32.totalorder %s51, %s67
      %p69 = scmp.eq.s32.totalorder %s22, 0
      %p70 = por %p68, %p69
      %s71 = ssub.s32 %s25, %s34
      %s72 = ssub.s32 %s24, %s38
      %s73 = sor.u32 %s71, %s72
      %p74 = scmp.eq.s32.totalorder %s73, 0
      %s76 = sadd.s32 %s75, 1
      %s77 = scalar_select %p74, %s75, %s76
      %p80 = pneg %p74
      %p81 = scmp.eq.s32.totalorder %s16, 1
      %p82 = por %p80, %p81
      %p83 = scmp.ne.s32.totalorder %s75, %s78
      %p84 = scmp.eq.s32.totalorder %s16, 0
      %p85 = por %p83, %p84
      %p86 = scmp.ne.s32.totalorder %s75, %s78
      %p87 = scmp.eq.s32.totalorder %s21, 1
      %p88 = por %p86, %p87
      %p89 = scmp.ne.s32.totalorder %s78, %s79
      %p90 = scmp.eq.s32.totalorder %s21, 0
      %p91 = por %p89, %p90
      %p92 = scmp.ne.s32.totalorder %s78, %s79
      %p93 = scmp.eq.s32.totalorder %s22, 1
      %p94 = por %p92, %p93
      %p96 = scmp.ne.s32.totalorder %s79, %s95
      %p97 = scmp.eq.s32.totalorder %s22, 0
      %p98 = por %p96, %p97
      %s99 = ssub.s32 %s24, %s38
      %p100 = scmp.eq.s32.totalorder %s99, 0
      %s102 = sadd.s32 %s101, 1
      %s103 = scalar_select %p100, %s101, %s102
      %p106 = pneg %p100
      %p107 = scmp.eq.s32.totalorder %s16, 1
      %p108 = por %p106, %p107
      %p109 = scmp.ne.s32.totalorder %s101, %s104
      %p110 = scmp.eq.s32.totalorder %s16, 0
      %p111 = por %p109, %p110
      %p112 = scmp.ne.s32.totalorder %s101, %s104
      %p113 = scmp.eq.s32.totalorder %s21, 1
      %p114 = por %p112, %p113
      %p115 = scmp.ne.s32.totalorder %s104, %s105
      %p116 = scmp.eq.s32.totalorder %s21, 0
      %p117 = por %p115, %p116
      %p118 = scmp.ne.s32.totalorder %s104, %s105
      %p119 = scmp.eq.s32.totalorder %s22, 1
      %p120 = por %p118, %p119
      %p122 = scmp.ne.s32.totalorder %s105, %s121
      %p123 = scmp.eq.s32.totalorder %s22, 0
      %p124 = por %p122, %p123
      %s125 = ssub.s32 %s23, %s42
      %s126 = ssub.s32 %s24, %s38
      %s127 = sor.u32 %s125, %s126
      %p128 = scmp.eq.s32.totalorder %s127, 0
      %s130 = sadd.s32 %s129, 1
      %s131 = scalar_select %p128, %s129, %s130
      %p134 = pneg %p128
      %p135 = scmp.eq.s32.totalorder %s16, 1
      %p136 = por %p134, %p135
      %p137 = scmp.ne.s32.totalorder %s129, %s132
      %p138 = scmp.eq.s32.totalorder %s16, 0
      %p139 = por %p137, %p138
      %p140 = scmp.ne.s32.totalorder %s129, %s132
      %p141 = scmp.eq.s32.totalorder %s21, 1
      %p142 = por %p140, %p141
      %p143 = scmp.ne.s32.totalorder %s132, %s133
      %p144 = scmp.eq.s32.totalorder %s21, 0
      %p145 = por %p143, %p144
      %p146 = scmp.ne.s32.totalorder %s132, %s133
      %p147 = scmp.eq.s32.totalorder %s22, 1
      %p148 = por %p146, %p147
      %p150 = scmp.ne.s32.totalorder %s133, %s149
      %p151 = scmp.eq.s32.totalorder %s22, 0
      %p152 = por %p150, %p151
      %p153 = scmp.le.s32.totalorder 1, %s16
      %p154 = scmp.lt.s32.totalorder %s16, 3
      %p155 = pnand %p153, %p154
      %p156 = pneg %p155
      // Predicated region
      $region9: #{tpu_custom_call.1} parent=5 // pred_check
        _
      $region10: #{tpu_custom_call.1} parent=5 // pred_check_branch
        %158 = sbr.rel (%p155) target = $region12
      $region11: #{tpu_custom_call.1} parent=5 // pred_region
        %s159 = ssub.s32 %s16, 1
        // Predicated region
        $region13: #{tpu_custom_call.1} parent=11 // pred_check
          %p160 = pneg %p91
        $region14: #{tpu_custom_call.1} parent=11 // pred_check_branch
          %162 = sbr.rel (%p160) target = $region16
        $region15: #{tpu_custom_call.1} parent=11 // pred_region
          %s163 = smul.u32 16, %s28
          %s165 = ssub.s32 1024, 1024
          %166 = vsyncadd [#allocation6], %s165
          %s167 = sadd.s32 %s27, %s163
          %s168 = smul.addr %s167, 64
          %s169 = scalar_lea.hbm %s1, %s168
          %s170 = sshll.u32 [#allocation5], 4
          %s171 = int_to_ptr.vmem [resolvable:$true] %s170
          %176 = dma.hbm_to_vmem [thread:$0]  %s169, 1024, %s171, [#allocation6], 64, 64, 4
        $region16: #{tpu_custom_call.1} parent=11 // pred_fallthru
          _
        // Predicated region
        $region17: #{tpu_custom_call.1} parent=11 // pred_check
          %p177 = pneg %p117
        $region18: #{tpu_custom_call.1} parent=11 // pred_check_branch
          %179 = sbr.rel (%p177) target = $region20
        $region19: #{tpu_custom_call.1} parent=11 // pred_region
          %s181 = ssub.s32 128, 128
          %182 = vsyncadd [#allocation6], %s181
          %s183 = smul.addr %s27, 128
          %s184 = scalar_lea.hbm %s2, %s183
          %s186 = sshll.u32 [#allocation7], 4
          %s187 = int_to_ptr.vmem [resolvable:$true] %s186
          %189 = dma.hbm_to_vmem [thread:$0]  %s184, 128, %s187, [#allocation6]
        $region20: #{tpu_custom_call.1} parent=11 // pred_fallthru
          _
      $region12: #{tpu_custom_call.1} parent=5 // pred_fallthru
        _
      %p190 = scmp.lt.s32.totalorder %s16, 2
      // Predicated region
      $region21: #{tpu_custom_call.1} parent=5 // pred_check
        %p191 = pneg %p190
      $region22: #{tpu_custom_call.1} parent=5 // pred_check_branch
        %193 = sbr.rel (%p191) target = $region24
      $region23: #{tpu_custom_call.1} parent=5 // pred_region
        // Predicated region
        $region25: #{tpu_custom_call.1} parent=23 // pred_check
          %p194 = pneg %p57
        $region26: #{tpu_custom_call.1} parent=23 // pred_check_branch
          %196 = sbr.rel (%p194) target = $region28
        $region27: #{tpu_custom_call.1} parent=23 // pred_region
          %s197 = sand.u32 %s47, 1
          %s198 = scalar_lea.sflag [#allocation3], %s197
          %s199 = sand.u32 %s47, 1
          %s200 = smul.addr %s199, 32
          %s201 = scalar_lea.vmem [#allocation2], %s200
          %s202 = smul.u32 8, %s23
          %s204 = ssub.s32 512, 512
          %205 = vsyncadd %s198, %s204
          %s206 = sadd.s32 %s25, %s202
          %s207 = smul.addr %s206, 64
          %s208 = scalar_lea.hbm %s0, %s207
          %s209 = sshll.u32 %s201, 4
          %s210 = int_to_ptr.vmem [resolvable:$true] %s209
          %215 = dma.hbm_to_vmem [thread:$0]  %s208, 512, %s210, %s198, 64, 64, 4
        $region28: #{tpu_custom_call.1} parent=23 // pred_fallthru
          _
      $region24: #{tpu_custom_call.1} parent=5 // pred_fallthru
        _
      %p216 = scmp.le.s32.totalorder 1, %s16
      %p217 = scmp.lt.s32.totalorder %s16, 3
      %p218 = pnand %p216, %p217
      %p219 = pneg %p218
      // Predicated region
      $region29: #{tpu_custom_call.1} parent=5 // pred_check
        _
      $region30: #{tpu_custom_call.1} parent=5 // pred_check_branch
        %221 = sbr.rel (%p218) target = $region32
      $region31: #{tpu_custom_call.1} parent=5 // pred_region
        %s222 = ssub.s32 %s16, 1
        %s223 = sand.u32 %s50, 1
        %s224 = scalar_lea.sflag [#allocation3], %s223
        %s225 = sand.u32 %s50, 1
        %s226 = smul.addr %s225, 32
        %s227 = scalar_lea.vmem [#allocation2], %s226
        // Predicated region
        $region33: #{tpu_custom_call.1} parent=31 // pred_check
          %p228 = pneg %p63
        $region34: #{tpu_custom_call.1} parent=31 // pred_check_branch
          %230 = sbr.rel (%p228) target = $region36
        $region35: #{tpu_custom_call.1} parent=31 // pred_region
          %231 = dma.done %s224, 512
        $region36: #{tpu_custom_call.1} parent=31 // pred_fallthru
          _
        // Predicated region
        $region37: #{tpu_custom_call.1} parent=31 // pred_check
          %p232 = pneg %p91
        $region38: #{tpu_custom_call.1} parent=31 // pred_check_branch
          %234 = sbr.rel (%p232) target = $region40
        $region39: #{tpu_custom_call.1} parent=31 // pred_region
          %235 = dma.done [#allocation6], 1024
        $region40: #{tpu_custom_call.1} parent=31 // pred_fallthru
          _
        // Predicated region
        $region41: #{tpu_custom_call.1} parent=31 // pred_check
          %p236 = pneg %p117
        $region42: #{tpu_custom_call.1} parent=31 // pred_check_branch
          %238 = sbr.rel (%p236) target = $region44
        $region43: #{tpu_custom_call.1} parent=31 // pred_region
          %239 = dma.done [#allocation6], 128
        $region44: #{tpu_custom_call.1} parent=31 // pred_fallthru
          _
        %s240 = sand.u32 %s50, 1
        %s241 = scalar_lea.sflag [#allocation3], %s240
        %s242 = sand.u32 %s50, 1
        %s243 = smul.addr %s242, 32
        %s244 = scalar_lea.vmem [#allocation2], %s243
        %p245 = pneg %p63
        %p246 = pneg %p60
        %p247 = pneg %p91
        %p248 = pneg %p88
        %p249 = pneg %p117
        %p250 = pneg %p114
        %p251 = pneg %p145
        %p252 = pneg %p142
        %s253 = sand.u32 %s132, 1
        %s254 = scalar_lea.sflag [#allocation4], %s253
        %s255 = sand.u32 %s132, 1
        %s256 = smul.addr %s255, 64
        %s257 = scalar_lea.vmem [#allocation8], %s256
        %s258 = smul.u32 8, %s26
        %s259 = smul.u32 16, %s28
        %s260 = smul.u32 8, %s26
        %v262 = vld [vmem:[%s227] sm:$0xf]
        %v263 = vld [vmem:[%s227 + $0x4] sm:$0xf]
        %v264 = vld [vmem:[%s227 + $0x8] sm:$0xf]
        %v265 = vld [vmem:[%s227 + $0xc] sm:$0xf]
        %v266 = vld [vmem:[%s227 + $0x10] sm:$0xf]
        %v267 = vld [vmem:[%s227 + $0x14] sm:$0xf]
        %v268 = vld [vmem:[%s227 + $0x18] sm:$0xf]
        %v269 = vld [vmem:[%s227 + $0x1c] sm:$0xf]
        %v270 = vld [vmem:[#allocation5] sm:$0xf]
        %v271 = vld [vmem:[#allocation5 + $0x4] sm:$0xf]
        %v272 = vld [vmem:[#allocation5 + $0x8] sm:$0xf]
        %v273 = vld [vmem:[#allocation5 + $0xc] sm:$0xf]
        %v274 = vld [vmem:[#allocation5 + $0x10] sm:$0xf]
        %v275 = vld [vmem:[#allocation5 + $0x14] sm:$0xf]
        %v276 = vld [vmem:[#allocation5 + $0x18] sm:$0xf]
        %v277 = vld [vmem:[#allocation5 + $0x1c] sm:$0xf]
        %v278 = vld [vmem:[#allocation5 + $0x20] sm:$0xf]
        %v279 = vld [vmem:[#allocation5 + $0x24] sm:$0xf]
        %v280 = vld [vmem:[#allocation5 + $0x28] sm:$0xf]
        %v281 = vld [vmem:[#allocation5 + $0x2c] sm:$0xf]
        %v282 = vld [vmem:[#allocation5 + $0x30] sm:$0xf]
        %v283 = vld [vmem:[#allocation5 + $0x34] sm:$0xf]
        %v284 = vld [vmem:[#allocation5 + $0x38] sm:$0xf]
        %v285 = vld [vmem:[#allocation5 + $0x3c] sm:$0xf]
        %v286 = vld [vmem:[#allocation7] sm:$0x1]
        %v287 = vlaneseq
        %v288 = vshrl.u32 %v287, 7
        %v289 = vsub.s32 0, %v288
        %v290 = vrot.slane %v286, %v289
        %v299 = vunpack.c.l.b16 %v262
        %v300 = vunpack.c.l.b16 %v263
        %v301 = vunpack.c.l.b16 %v264
        %v302 = vunpack.c.l.b16 %v265
        %v303 = vunpack.c.l.b16 %v266
        %v304 = vunpack.c.l.b16 %v267
        %v305 = vunpack.c.l.b16 %v268
        %v306 = vunpack.c.l.b16 %v269
        %v307 = vpack.c.b16 %v300, %v299
        %v308 = vpack.c.b16 %v302, %v301
        %v309 = vpack.c.b16 %v304, %v303
        %v310 = vpack.c.b16 %v306, %v305
        %v331 = vunpack.c.l.b16 %v270
        %v332 = vunpack.c.l.b16 %v271
        %v333 = vunpack.c.l.b16 %v272
        %v334 = vunpack.c.l.b16 %v273
        %v335 = vunpack.c.l.b16 %v274
        %v336 = vunpack.c.l.b16 %v275
        %v337 = vunpack.c.l.b16 %v276
        %v338 = vunpack.c.l.b16 %v277
        %v339 = vunpack.c.l.b16 %v278
        %v340 = vunpack.c.l.b16 %v279
        %v341 = vunpack.c.l.b16 %v280
        %v342 = vunpack.c.l.b16 %v281
        %v343 = vunpack.c.l.b16 %v282
        %v344 = vunpack.c.l.b16 %v283
        %v345 = vunpack.c.l.b16 %v284
        %v346 = vunpack.c.l.b16 %v285
        %v347 = vpack.c.b16 %v332, %v331
        %v348 = vpack.c.b16 %v334, %v333
        %v349 = vpack.c.b16 %v336, %v335
        %v350 = vpack.c.b16 %v338, %v337
        %v351 = vpack.c.b16 %v340, %v339
        %v352 = vpack.c.b16 %v342, %v341
        %v353 = vpack.c.b16 %v344, %v343
        %v354 = vpack.c.b16 %v346, %v345
        %363 = vmatprep.subr.bf16.mxu0 0
        %364 = vmatpush1.bf16.msra.mxu0 %v347
        %365 = vmatprep.subr.bf16.mxu0 0
        %366 = vmatpush1.bf16.msra.mxu0 %v348
        %367 = vmatprep.subr.bf16.mxu0 0
        %368 = vmatpush1.bf16.msra.mxu0 %v349
        %369 = vmatprep.subr.bf16.mxu0 0
        %370 = vmatpush1.bf16.msra.mxu0 %v350
        %371 = vmatprep.subr.bf16.mxu0 0
        %372 = vmatpush1.bf16.msra.mxu0 %v351
        %373 = vmatprep.subr.bf16.mxu0 0
        %374 = vmatpush1.bf16.msra.mxu0 %v352
        %375 = vmatprep.subr.bf16.mxu0 0
        %376 = vmatpush1.bf16.msra.mxu0 %v353
        %377 = vmatprep.subr.bf16.mxu0 0
        %378 = vmatpush1.bf16.msra.mxu0 %v354
        %379 = vmatprep.subr.bf16.mxu0 0
        %380 = vmatpush1.bf16.msra.mxu0 0
        %381 = vmatprep.subr.bf16.mxu0 0
        %382 = vmatpush1.bf16.msra.mxu0 0
        %383 = vmatprep.subr.bf16.mxu0 0
        %384 = vmatpush1.bf16.msra.mxu0 0
        %385 = vmatprep.subr.bf16.mxu0 0
        %386 = vmatpush1.bf16.msra.mxu0 0
        %387 = vmatprep.subr.bf16.mxu0 0
        %388 = vmatpush1.bf16.msra.mxu0 0
        %389 = vmatprep.subr.bf16.mxu0 0
        %390 = vmatpush1.bf16.msra.mxu0 0
        %391 = vmatprep.subr.bf16.mxu0 0
        %392 = vmatpush1.bf16.msra.mxu0 0
        %393 = vmatprep.subr.bf16.mxu0 0
        %394 = vmatpush1.bf16.msra.mxu0 0
        %395 = vmatprep.mubr.bf16.mxu0 0
        %396 = vmatmul.mubr.bf16.gmra.mrb[0].mxu0 %v307
        %v397 = vpop.f32.mrb[0].mxu0
        %v398 = vadd.f32 %v290, %v397
        %v399 = vpop.f32.mrb[0].mxu0
        %v400 = vpop.f32.mrb[0].mxu0
        %v401 = vadd.f32 %v290, %v400
        %v402 = vpop.f32.mrb[0].mxu0
        %403 = vmatprep.mubr.bf16.mxu0 0
        %404 = vmatmul.mubr.bf16.gmra.mrb[0].mxu0 %v308
        %v405 = vpop.f32.mrb[0].mxu0
        %v406 = vadd.f32 %v290, %v405
        %v407 = vpop.f32.mrb[0].mxu0
        %v408 = vpop.f32.mrb[0].mxu0
        %v409 = vadd.f32 %v290, %v408
        %v410 = vpop.f32.mrb[0].mxu0
        %411 = vmatprep.mubr.bf16.mxu0 0
        %412 = vmatmul.mubr.bf16.gmra.mrb[0].mxu0 %v309
        %v413 = vpop.f32.mrb[0].mxu0
        %v414 = vadd.f32 %v290, %v413
        %v415 = vpop.f32.mrb[0].mxu0
        %v416 = vpop.f32.mrb[0].mxu0
        %v417 = vadd.f32 %v290, %v416
        %v418 = vpop.f32.mrb[0].mxu0
        %419 = vmatprep.mubr.bf16.mxu0 0
        %420 = vmatmul.mubr.bf16.gmra.mrb[0].mxu0 %v310
        %v421 = vpop.f32.mrb[0].mxu0
        %v422 = vadd.f32 %v290, %v421
        %v423 = vpop.f32.mrb[0].mxu0
        %v424 = vpop.f32.mrb[0].mxu0
        %v425 = vadd.f32 %v290, %v424
        %v426 = vpop.f32.mrb[0].mxu0
        %427 = vdwg.mxu0
        %428 = vst [vmem:[%s257] sm:$0xff] %v398
        %429 = vst [vmem:[%s257 + $0x8] sm:$0xff] %v401
        %430 = vst [vmem:[%s257 + $0x10] sm:$0xff] %v406
        %431 = vst [vmem:[%s257 + $0x18] sm:$0xff] %v409
        %432 = vst [vmem:[%s257 + $0x20] sm:$0xff] %v414
        %433 = vst [vmem:[%s257 + $0x28] sm:$0xff] %v417
        %434 = vst [vmem:[%s257 + $0x30] sm:$0xff] %v422
        %435 = vst [vmem:[%s257 + $0x38] sm:$0xff] %v425
        %s436 = sand.u32 %s132, 1
        %s437 = scalar_lea.sflag [#allocation4], %s436
        %s438 = sand.u32 %s132, 1
        %s439 = smul.addr %s438, 64
        %s440 = scalar_lea.vmem [#allocation8], %s439
        // Predicated region
        $region45: #{tpu_custom_call.1} parent=31 // pred_check
          %p441 = pneg %p142
        $region46: #{tpu_custom_call.1} parent=31 // pred_check_branch
          %443 = sbr.rel (%p441) target = $region48
        $region47: #{tpu_custom_call.1} parent=31 // pred_region
          %s444 = smul.u32 8, %s26
          %s446 = ssub.s32 1024, 1024
          %447 = vsyncadd %s437, %s446
          %s448 = sadd.s32 %s27, %s444
          %s449 = smul.addr %s448, 128
          %s450 = scalar_lea.hbm %s3, %s449
          %s451 = sshll.u32 %s440, 4
          %s452 = int_to_ptr.vmem [resolvable:$true] %s451
          %457 = dma.vmem_to_hbm [thread:$0]  %s452, 1024, %s450, %s437, 128, 128, 8
        $region48: #{tpu_custom_call.1} parent=31 // pred_fallthru
          _
      $region32: #{tpu_custom_call.1} parent=5 // pred_fallthru
        _
      %p458 = scmp.le.s32.totalorder 2, %s16
      // Predicated region
      $region49: #{tpu_custom_call.1} parent=5 // pred_check
        %p459 = pneg %p458
      $region50: #{tpu_custom_call.1} parent=5 // pred_check_branch
        %461 = sbr.rel (%p459) target = $region52
      $region51: #{tpu_custom_call.1} parent=5 // pred_region
        %s462 = ssub.s32 %s16, 2
        // Predicated region
        $region53: #{tpu_custom_call.1} parent=51 // pred_check
          %p463 = pneg %p148
        $region54: #{tpu_custom_call.1} parent=51 // pred_check_branch
          %465 = sbr.rel (%p463) target = $region56
        $region55: #{tpu_custom_call.1} parent=51 // pred_region
          %s466 = sand.u32 %s133, 1
          %s467 = scalar_lea.sflag [#allocation4], %s466
          %s468 = sand.u32 %s133, 1
          %s469 = smul.addr %s468, 64
          %s470 = scalar_lea.vmem [#allocation8], %s469
          %471 = dma.done %s467, 1024
        $region56: #{tpu_custom_call.1} parent=51 // pred_fallthru
          _
      $region52: #{tpu_custom_call.1} parent=5 // pred_fallthru
        _
    $region6: #{tpu_custom_call.1} parent=1 // loop_footer
      %s20 = sadd.s32 1, %s16
    $region7: #{tpu_custom_call.1} parent=1 // loop_footer_branch
      %15 = sbr.rel target = $region3
    $region8: #{tpu_custom_call.1} parent=1 // loop_exit
      _
    %472 = vsyncpa [#allocation3], 1
    %s473 = scalar_lea.sflag [#allocation3], 1
    %474 = vsyncpa %s473, 1
    %475 = vsyncpa [#allocation6], 1
    %476 = vsyncpa [#allocation4], 1
    %s477 = scalar_lea.sflag [#allocation4], 1
    %478 = vsyncpa %s477, 1

</llo_original>
